<compile_context>
chip_gen: v7x
topology: tpu7x:2x2x1
jax: 0.10.0
libtpu: 0.0.40
codegen_flags: <defaults>
</compile_context>

<pallas_src>
import functools

import jax
import jax.numpy as jnp
from jax.experimental import pallas as pl
from jax.experimental.pallas import tpu as pltpu

LN_EPS = 1e-5


def _round_up(x, m):
    return ((x + m - 1) // m) * m


def _vmem_capacity_bytes():
    """Physical VMEM capacity (per TensorCore) with a conservative fallback."""
    try:
        info = pltpu.get_tpu_info()
        cap = getattr(info, "vmem_capacity_bytes", None)
        if cap:
            return int(cap)
    except Exception:
        pass
    return 64 * 1024 * 1024  # v7x-conservative default


def _processor_res_kernel(x_ref,
                          w_in_ref, b_in_ref,
                          w_h0_ref, b_h0_ref,
                          w_h1_ref, b_h1_ref,
                          w_out_ref, b_out_ref,
                          gamma_ref, beta_ref,
                          o_ref, *, out_features):
    """One row-tile of the full forward pass (MLP + residual + LayerNorm).

    Hidden channels are zero-padded to a multiple of 128 (weights only; padded
    channels stay exactly zero through bias+ReLU).  The output width is the
    real out_features, so LayerNorm needs no masking.
    """
    # fc_in + ReLU  (bf16 MXU operands, f32 accumulation, f32 elementwise).
    h = jnp.dot(x_ref[...].astype(jnp.bfloat16), w_in_ref[...],
                preferred_element_type=jnp.float32)
    h = jnp.maximum(h + b_in_ref[...], 0.0).astype(jnp.bfloat16)
    # fc_h0 + ReLU
    h = jnp.dot(h, w_h0_ref[...], preferred_element_type=jnp.float32)
    h = jnp.maximum(h + b_h0_ref[...], 0.0).astype(jnp.bfloat16)
    # fc_h1 + ReLU
    h = jnp.dot(h, w_h1_ref[...], preferred_element_type=jnp.float32)
    h = jnp.maximum(h + b_h1_ref[...], 0.0).astype(jnp.bfloat16)
    # fc_out + bias + residual (residual read from x, exact f32).
    y = jnp.dot(h, w_out_ref[...], preferred_element_type=jnp.float32)
    y = y + b_out_ref[...] + x_ref[:, :out_features]          # (tm, out_f)

    # LayerNorm over the real out_features width (no padded lanes, no mask).
    inv_n = 1.0 / out_features
    mean = jnp.sum(y, axis=-1, keepdims=True) * inv_n
    centered = y - mean
    var = jnp.sum(centered * centered, axis=-1, keepdims=True) * inv_n
    inv = jax.lax.rsqrt(var + LN_EPS)
    o_ref[...] = (centered * inv * gamma_ref[...] + beta_ref[...]).astype(o_ref.dtype)


def processor_res_forward(x_in, params, *, tile_rows=None):
    """x_in: (B, N, in_features) float32.  Returns (B, N, out_features)."""
    B, N, in_f = x_in.shape
    hid_f = params["w_in"].shape[1]
    out_f = params["w_out"].shape[1]
    assert out_f <= in_f, "residual x_in[:, :, :out_features] requires out <= in"

    M = B * N
    hid_pad = _round_up(hid_f, 128)  # 128-lane padding only on hidden weights

    def pad2(a, rows, cols):
        return jnp.pad(a, ((0, rows - a.shape[0]), (0, cols - a.shape[1])))

    # Weights/biases: hidden dims padded to a multiple of 128; padded hidden
    # channels stay exactly zero (zero cols/rows + zero bias + ReLU(0)=0).
    w_in = pad2(params["w_in"], in_f, hid_pad).astype(jnp.bfloat16)
    b_in = pad2(params["b_in"], 1, hid_pad)
    w_h0 = pad2(params["w_h0"], hid_pad, hid_pad).astype(jnp.bfloat16)
    b_h0 = pad2(params["b_h0"], 1, hid_pad)
    w_h1 = pad2(params["w_h1"], hid_pad, hid_pad).astype(jnp.bfloat16)
    b_h1 = pad2(params["b_h1"], 1, hid_pad)
    w_out = pad2(params["w_out"], hid_pad, out_f).astype(jnp.bfloat16)
    b_out = params["b_out"]            # (1, out_f)
    gamma = params["gamma"]            # (1, out_f)
    beta = params["beta"]              # (1, out_f)

    # --- generation-aware VMEM budget & row-tile selection -----------------
    vmem_cap = _vmem_capacity_bytes()
    vmem_limit = min(96 * 1024 * 1024, (vmem_cap * 3) // 4)   # 96 MiB on v5e/v6e, ~48 MiB on v7x
    tm_cap = 1024 if vmem_cap >= 100 * 1024 * 1024 else 512
    if tile_rows is not None:
        tm_cap = tile_rows

    weight_bytes_single = 2 * (w_in.size + w_h0.size + w_h1.size + w_out.size)  # bf16
    # Single-buffer the (constant index_map) replicated operands only when they
    # are big enough to pressure VMEM; halves their resident footprint.
    single_buffer_weights = weight_bytes_single > 4 * 1024 * 1024
    weight_buffers = 1 if single_buffer_weights else 2
    small_bytes = 2 * 4 * (b_in.size + b_h0.size + b_h1.size + b_out.size
                           + gamma.size + beta.size)

    def step_bytes(t):
        io = 2 * 4 * t * (in_f + out_f)        # double-buffered x / out tiles (f32)
        scratch = t * hid_pad * (4 + 2) * 2    # f32 intermediate + bf16 copy, ~2 stages live
        return weight_buffers * weight_bytes_single + small_bytes + io + scratch

    tm = _round_up(min(tm_cap, _round_up(M, 8)), 8)
    while tm > 64 and step_bytes(tm) > int(0.8 * vmem_limit):
        tm = _round_up(max(64, tm // 2), 8)

    steps = -(-M // tm)
    if M % tm != 0 and steps > 1 and steps % 2 == 1:
        steps += 1                              # even step count: balance v7x's two TensorCores
    M_pad = steps * tm

    x2d = x_in.reshape(M, in_f).astype(jnp.float32)
    if M_pad != M:
        x2d = jnp.pad(x2d, ((0, M_pad - M), (0, 0)))   # zero rows, sliced off after

    row_map = lambda i: (i, 0)
    rep_map = lambda i: (0, 0)

    def rep_spec(arr):
        if single_buffer_weights:
            return pl.BlockSpec(arr.shape, rep_map, pipeline_mode=pl.Buffered(1))
        return pl.BlockSpec(arr.shape, rep_map)

    in_specs = [
        pl.BlockSpec((tm, in_f), row_map),     # x rows at natural width (only big HBM stream)
        rep_spec(w_in), rep_spec(b_in),
        rep_spec(w_h0), rep_spec(b_h0),
        rep_spec(w_h1), rep_spec(b_h1),
        rep_spec(w_out), rep_spec(b_out),
        rep_spec(gamma), rep_spec(beta),
    ]
    out_spec = pl.BlockSpec((tm, out_f), row_map)      # direct (no pad, no post-slice) output

    kernel = functools.partial(_processor_res_kernel, out_features=out_f)

    y2d = pl.pallas_call(
        kernel,
        out_shape=jax.ShapeDtypeStruct((M_pad, out_f), x_in.dtype),
        grid_spec=pltpu.PrefetchScalarGridSpec(
            num_scalar_prefetch=0,
            grid=(steps,),
            in_specs=in_specs,
            out_specs=out_spec,
        ),
        compiler_params=pltpu.CompilerParams(
            dimension_semantics=("parallel",),
            vmem_limit_bytes=vmem_limit),
    )(x2d, w_in, b_in, w_h0, b_h0, w_h1, b_h1, w_out, b_out, gamma, beta)

    if M_pad != M:
        y2d = y2d[:M]
    return y2d.reshape(B, N, out_f)


def init_params(key, in_features, hidden_features, out_features):
    """Deterministic synthetic parameters (uniform, like PyTorch default scale)."""
    ks = jax.random.split(key, 8)

    def linear(kw, kb, fan_in, fan_out):
        bound = 1.0 / jnp.sqrt(fan_in)
        w = jax.random.uniform(kw, (fan_in, fan_out), jnp.float32, -bound, bound)
        b = jax.random.uniform(kb, (1, fan_out), jnp.float32, -bound, bound)
        return w, b

    w_in, b_in = linear(ks[0], ks[1], in_features, hidden_features)
    w_h0, b_h0 = linear(ks[2], ks[3], hidden_features, hidden_features)
    w_h1, b_h1 = linear(ks[4], ks[5], hidden_features, hidden_features)
    w_out, b_out = linear(ks[6], ks[7], hidden_features, out_features)
    gamma = jnp.ones((1, out_features), jnp.float32)
    beta = jnp.zeros((1, out_features), jnp.float32)
    return dict(w_in=w_in, b_in=b_in, w_h0=w_h0, b_h0=b_h0,
                w_h1=w_h1, b_h1=b_h1, w_out=w_out, b_out=b_out,
                gamma=gamma, beta=beta)


def reference_forward(x_in, p):
    """Pure-JAX reference mirroring the PyTorch forward (norm_type='ln')."""
    B, N, _ = x_in.shape
    out_f = p["w_out"].shape[1]
    x = jnp.maximum(x_in @ p["w_in"] + p["b_in"], 0.0)
    x = jnp.maximum(x @ p["w_h0"] + p["b_h0"], 0.0)
    x = jnp.maximum(x @ p["w_h1"] + p["b_h1"], 0.0)
    x = x @ p["w_out"] + p["b_out"]
    x = x + x_in[:, :, :out_f]
    x = x.reshape(-1, out_f)
    mean = jnp.mean(x, axis=-1, keepdims=True)
    var = jnp.mean((x - mean) ** 2, axis=-1, keepdims=True)
    x = (x - mean) / jnp.sqrt(var + LN_EPS) * p["gamma"] + p["beta"]
    return x.reshape(B, N, out_f)


if __name__ == "__main__":
    key = jax.random.PRNGKey(0)
    kx, kp = jax.random.split(key)

    B, N = 2, 8
    in_features, hidden_features, out_features = 32, 64, 16

    x_in = jax.random.normal(kx, (B, N, in_features), jnp.float32)
    params = init_params(kp, in_features, hidden_features, out_features)

    y = processor_res_forward(x_in, params)
    y = jax.block_until_ready(y)

    y_ref = jax.block_until_ready(reference_forward(x_in, params))
    assert y.shape == (B, N, out_features)
    # bf16 MXU operands / bf16 inter-layer activations (f32 accumulation,
    # f32 elementwise & exact f32 residual) -> slightly looser tolerance.
    assert jnp.allclose(y, y_ref, atol=5e-2, rtol=5e-2), "mismatch vs reference"

    print("KERNEL_OK")
</pallas_src>

<mosaic_0001>
module attributes {stable_mosaic.version = 11 : i64} {
  func.func @_processor_res_kernel(%arg0: i32, %arg1: memref<16x32xf32, #tpu.memory_space<vmem>>, %arg2: memref<32x128xbf16, #tpu.memory_space<vmem>>, %arg3: memref<1x128xf32, #tpu.memory_space<vmem>>, %arg4: memref<128x128xbf16, #tpu.memory_space<vmem>>, %arg5: memref<1x128xf32, #tpu.memory_space<vmem>>, %arg6: memref<128x128xbf16, #tpu.memory_space<vmem>>, %arg7: memref<1x128xf32, #tpu.memory_space<vmem>>, %arg8: memref<128x16xbf16, #tpu.memory_space<vmem>>, %arg9: memref<1x16xf32, #tpu.memory_space<vmem>>, %arg10: memref<1x16xf32, #tpu.memory_space<vmem>>, %arg11: memref<1x16xf32, #tpu.memory_space<vmem>>, %arg12: memref<16x16xf32, #tpu.memory_space<vmem>>) attributes {dimension_semantics = [#tpu.dimension_semantics<parallel>], iteration_bounds = array<i64: 1>, scalar_prefetch = 0 : i64, scratch_operands = 0 : i64, tpu.core_type = #tpu.core_type<tc>, window_params = [{transform_indices = @transform_0, window_bounds = array<i64: 16, 32>}, {pipeline_mode = #tpu.pipeline_mode<synchronous>, transform_indices = @transform_1, window_bounds = array<i64: 32, 128>}, {pipeline_mode = #tpu.pipeline_mode<synchronous>, transform_indices = @transform_2, window_bounds = array<i64: 1, 128>}, {pipeline_mode = #tpu.pipeline_mode<synchronous>, transform_indices = @transform_3, window_bounds = array<i64: 128, 128>}, {pipeline_mode = #tpu.pipeline_mode<synchronous>, transform_indices = @transform_4, window_bounds = array<i64: 1, 128>}, {pipeline_mode = #tpu.pipeline_mode<synchronous>, transform_indices = @transform_5, window_bounds = array<i64: 128, 128>}, {pipeline_mode = #tpu.pipeline_mode<synchronous>, transform_indices = @transform_6, window_bounds = array<i64: 1, 128>}, {pipeline_mode = #tpu.pipeline_mode<synchronous>, transform_indices = @transform_7, window_bounds = array<i64: 128, 16>}, {pipeline_mode = #tpu.pipeline_mode<synchronous>, transform_indices = @transform_8, window_bounds = array<i64: 1, 16>}, {pipeline_mode = #tpu.pipeline_mode<synchronous>, transform_indices = @transform_9, window_bounds = array<i64: 1, 16>}, {pipeline_mode = #tpu.pipeline_mode<synchronous>, transform_indices = @transform_10, window_bounds = array<i64: 1, 16>}, {transform_indices = @transform_11, window_bounds = array<i64: 16, 16>}]} {
    %c0 = arith.constant 0 : index
    %c0_0 = arith.constant 0 : index
    %0 = vector.load %arg1[%c0, %c0_0] : memref<16x32xf32, #tpu.memory_space<vmem>>, vector<16x32xf32>
    %1 = arith.truncf %0 : vector<16x32xf32> to vector<16x32xbf16>
    %c0_1 = arith.constant 0 : index
    %c0_2 = arith.constant 0 : index
    %2 = vector.load %arg2[%c0_1, %c0_2] : memref<32x128xbf16, #tpu.memory_space<vmem>>, vector<32x128xbf16>
    %cst = arith.constant dense<0.000000e+00> : vector<16x128xf32>
    %3 = tpu.matmul %1, %2, %cst {dimension_numbers = #tpu.dot_dimension_numbers<[1], [0], [0], [1], [0, 0, 1, 1], [], []>} : vector<16x32xbf16>, vector<32x128xbf16>, vector<16x128xf32> -> vector<16x128xf32>
    %c0_3 = arith.constant 0 : index
    %c0_4 = arith.constant 0 : index
    %4 = vector.load %arg3[%c0_3, %c0_4] : memref<1x128xf32, #tpu.memory_space<vmem>>, vector<1x128xf32>
    %5 = vector.broadcast %4 : vector<1x128xf32> to vector<16x128xf32>
    %6 = arith.addf %3, %5 : vector<16x128xf32>
    %cst_5 = arith.constant 0.000000e+00 : f32
    %7 = vector.broadcast %cst_5 : f32 to vector<16x128xf32>
    %8 = arith.maximumf %6, %7 : vector<16x128xf32>
    %9 = arith.truncf %8 : vector<16x128xf32> to vector<16x128xbf16>
    %c0_6 = arith.constant 0 : index
    %c0_7 = arith.constant 0 : index
    %10 = vector.load %arg4[%c0_6, %c0_7] : memref<128x128xbf16, #tpu.memory_space<vmem>>, vector<128x128xbf16>
    %cst_8 = arith.constant dense<0.000000e+00> : vector<16x128xf32>
    %11 = tpu.matmul %9, %10, %cst_8 {dimension_numbers = #tpu.dot_dimension_numbers<[1], [0], [0], [1], [0, 0, 1, 1], [], []>} : vector<16x128xbf16>, vector<128x128xbf16>, vector<16x128xf32> -> vector<16x128xf32>
    %c0_9 = arith.constant 0 : index
    %c0_10 = arith.constant 0 : index
    %12 = vector.load %arg5[%c0_9, %c0_10] : memref<1x128xf32, #tpu.memory_space<vmem>>, vector<1x128xf32>
    %13 = vector.broadcast %12 : vector<1x128xf32> to vector<16x128xf32>
    %14 = arith.addf %11, %13 : vector<16x128xf32>
    %cst_11 = arith.constant 0.000000e+00 : f32
    %15 = vector.broadcast %cst_11 : f32 to vector<16x128xf32>
    %16 = arith.maximumf %14, %15 : vector<16x128xf32>
    %17 = arith.truncf %16 : vector<16x128xf32> to vector<16x128xbf16>
    %c0_12 = arith.constant 0 : index
    %c0_13 = arith.constant 0 : index
    %18 = vector.load %arg6[%c0_12, %c0_13] : memref<128x128xbf16, #tpu.memory_space<vmem>>, vector<128x128xbf16>
    %cst_14 = arith.constant dense<0.000000e+00> : vector<16x128xf32>
    %19 = tpu.matmul %17, %18, %cst_14 {dimension_numbers = #tpu.dot_dimension_numbers<[1], [0], [0], [1], [0, 0, 1, 1], [], []>} : vector<16x128xbf16>, vector<128x128xbf16>, vector<16x128xf32> -> vector<16x128xf32>
    %c0_15 = arith.constant 0 : index
    %c0_16 = arith.constant 0 : index
    %20 = vector.load %arg7[%c0_15, %c0_16] : memref<1x128xf32, #tpu.memory_space<vmem>>, vector<1x128xf32>
    %21 = vector.broadcast %20 : vector<1x128xf32> to vector<16x128xf32>
    %22 = arith.addf %19, %21 : vector<16x128xf32>
    %cst_17 = arith.constant 0.000000e+00 : f32
    %23 = vector.broadcast %cst_17 : f32 to vector<16x128xf32>
    %24 = arith.maximumf %22, %23 : vector<16x128xf32>
    %25 = arith.truncf %24 : vector<16x128xf32> to vector<16x128xbf16>
    %c0_18 = arith.constant 0 : index
    %c0_19 = arith.constant 0 : index
    %26 = vector.load %arg8[%c0_18, %c0_19] : memref<128x16xbf16, #tpu.memory_space<vmem>>, vector<128x16xbf16>
    %cst_20 = arith.constant dense<0.000000e+00> : vector<16x16xf32>
    %27 = tpu.matmul %25, %26, %cst_20 {dimension_numbers = #tpu.dot_dimension_numbers<[1], [0], [0], [1], [0, 0, 1, 1], [], []>} : vector<16x128xbf16>, vector<128x16xbf16>, vector<16x16xf32> -> vector<16x16xf32>
    %c0_21 = arith.constant 0 : index
    %c0_22 = arith.constant 0 : index
    %28 = vector.load %arg9[%c0_21, %c0_22] : memref<1x16xf32, #tpu.memory_space<vmem>>, vector<1x16xf32>
    %29 = vector.broadcast %28 : vector<1x16xf32> to vector<16x16xf32>
    %30 = arith.addf %27, %29 : vector<16x16xf32>
    %c0_23 = arith.constant 0 : index
    %c0_24 = arith.constant 0 : index
    %31 = vector.load %arg1[%c0_23, %c0_24] : memref<16x32xf32, #tpu.memory_space<vmem>>, vector<16x16xf32>
    %32 = arith.addf %30, %31 : vector<16x16xf32>
    %cst_25 = arith.constant dense<0.000000e+00> : vector<16xf32>
    %33 = vector.multi_reduction <add>, %32, %cst_25 [1] : vector<16x16xf32> to vector<16xf32>
    %34 = vector.shape_cast %33 : vector<16xf32> to vector<16x1xf32>
    %cst_26 = arith.constant 6.250000e-02 : f32
    %35 = vector.broadcast %cst_26 : f32 to vector<16x1xf32>
    %36 = arith.mulf %34, %35 : vector<16x1xf32>
    %37 = vector.broadcast %36 : vector<16x1xf32> to vector<16x16xf32>
    %38 = arith.subf %32, %37 : vector<16x16xf32>
    %39 = arith.mulf %38, %38 : vector<16x16xf32>
    %cst_27 = arith.constant dense<0.000000e+00> : vector<16xf32>
    %40 = vector.multi_reduction <add>, %39, %cst_27 [1] : vector<16x16xf32> to vector<16xf32>
    %41 = vector.shape_cast %40 : vector<16xf32> to vector<16x1xf32>
    %cst_28 = arith.constant 6.250000e-02 : f32
    %42 = vector.broadcast %cst_28 : f32 to vector<16x1xf32>
    %43 = arith.mulf %41, %42 : vector<16x1xf32>
    %cst_29 = arith.constant 9.99999974E-6 : f32
    %44 = vector.broadcast %cst_29 : f32 to vector<16x1xf32>
    %45 = arith.addf %43, %44 : vector<16x1xf32>
    %46 = math.rsqrt %45 : vector<16x1xf32>
    %47 = vector.broadcast %46 : vector<16x1xf32> to vector<16x16xf32>
    %48 = arith.mulf %38, %47 : vector<16x16xf32>
    %c0_30 = arith.constant 0 : index
    %c0_31 = arith.constant 0 : index
    %49 = vector.load %arg10[%c0_30, %c0_31] : memref<1x16xf32, #tpu.memory_space<vmem>>, vector<1x16xf32>
    %50 = vector.broadcast %49 : vector<1x16xf32> to vector<16x16xf32>
    %51 = arith.mulf %48, %50 : vector<16x16xf32>
    %c0_32 = arith.constant 0 : index
    %c0_33 = arith.constant 0 : index
    %52 = vector.load %arg11[%c0_32, %c0_33] : memref<1x16xf32, #tpu.memory_space<vmem>>, vector<1x16xf32>
    %53 = vector.broadcast %52 : vector<1x16xf32> to vector<16x16xf32>
    %54 = arith.addf %51, %53 : vector<16x16xf32>
    %c0_34 = arith.constant 0 : index
    %c0_35 = arith.constant 0 : index
    %55 = vector.load %arg12[%c0_34, %c0_35] : memref<16x16xf32, #tpu.memory_space<vmem>>, vector<16x16xf32>
    tpu.vector_store %arg12[%c0_34, %c0_35], %54 {strides = array<i32>} : memref<16x16xf32, #tpu.memory_space<vmem>>, vector<16x16xf32>,
    return
  }
  func.func @transform_0(%arg0: i32) -> (i32, i32) {
    %c0_i32 = arith.constant 0 : i32
    %c0_i32_0 = arith.constant 0 : i32
    return %arg0, %c0_i32 : i32, i32
  }
  func.func @transform_1(%arg0: i32) -> (i32, i32) {
    %c0_i32 = arith.constant 0 : i32
    %c0_i32_0 = arith.constant 0 : i32
    %c0_i32_1 = arith.constant 0 : i32
    return %c0_i32, %c0_i32_0 : i32, i32
  }
  func.func @transform_2(%arg0: i32) -> (i32, i32) {
    %c0_i32 = arith.constant 0 : i32
    %c0_i32_0 = arith.constant 0 : i32
    %c0_i32_1 = arith.constant 0 : i32
    return %c0_i32, %c0_i32_0 : i32, i32
  }
  func.func @transform_3(%arg0: i32) -> (i32, i32) {
    %c0_i32 = arith.constant 0 : i32
    %c0_i32_0 = arith.constant 0 : i32
    %c0_i32_1 = arith.constant 0 : i32
    return %c0_i32, %c0_i32_0 : i32, i32
  }
  func.func @transform_4(%arg0: i32) -> (i32, i32) {
    %c0_i32 = arith.constant 0 : i32
    %c0_i32_0 = arith.constant 0 : i32
    %c0_i32_1 = arith.constant 0 : i32
    return %c0_i32, %c0_i32_0 : i32, i32
  }
  func.func @transform_5(%arg0: i32) -> (i32, i32) {
    %c0_i32 = arith.constant 0 : i32
    %c0_i32_0 = arith.constant 0 : i32
    %c0_i32_1 = arith.constant 0 : i32
    return %c0_i32, %c0_i32_0 : i32, i32
  }
  func.func @transform_6(%arg0: i32) -> (i32, i32) {
    %c0_i32 = arith.constant 0 : i32
    %c0_i32_0 = arith.constant 0 : i32
    %c0_i32_1 = arith.constant 0 : i32
    return %c0_i32, %c0_i32_0 : i32, i32
  }
  func.func @transform_7(%arg0: i32) -> (i32, i32) {
    %c0_i32 = arith.constant 0 : i32
    %c0_i32_0 = arith.constant 0 : i32
    %c0_i32_1 = arith.constant 0 : i32
    return %c0_i32, %c0_i32_0 : i32, i32
  }
  func.func @transform_8(%arg0: i32) -> (i32, i32) {
    %c0_i32 = arith.constant 0 : i32
    %c0_i32_0 = arith.constant 0 : i32
    %c0_i32_1 = arith.constant 0 : i32
    return %c0_i32, %c0_i32_0 : i32, i32
  }
  func.func @transform_9(%arg0: i32) -> (i32, i32) {
    %c0_i32 = arith.constant 0 : i32
    %c0_i32_0 = arith.constant 0 : i32
    %c0_i32_1 = arith.constant 0 : i32
    return %c0_i32, %c0_i32_0 : i32, i32
  }
  func.func @transform_10(%arg0: i32) -> (i32, i32) {
    %c0_i32 = arith.constant 0 : i32
    %c0_i32_0 = arith.constant 0 : i32
    %c0_i32_1 = arith.constant 0 : i32
    return %c0_i32, %c0_i32_0 : i32, i32
  }
  func.func @transform_11(%arg0: i32) -> (i32, i32) {
    %c0_i32 = arith.constant 0 : i32
    %c0_i32_0 = arith.constant 0 : i32
    return %arg0, %c0_i32 : i32, i32
  }
}

</mosaic_0001>

<llo_original>
// kernel: tpu_custom_call.1
$region0: #{tpu_custom_call.1}
  #allocation0 [shape = 'u32[]', space=smem, size = 0x4, offset = 0x4, fixed_abs, tag = 'smem constant byte address 0x4 - core index']
  #allocation1 [shape = 'u32[144,128]{1,0:T(1,128)}', space=vmem, size = 0x12000, scoped, tag = 'internal scratch']
  %s0 = inlined_call_operand.vmem [shape: f32[16,32], index: 0, kind: input, shape index: {}]
  %s1 = inlined_call_operand.hbm [shape: bf16[32,128], index: 1, kind: input, shape index: {}]
  %s2 = inlined_call_operand.vmem [shape: f32[1,128], index: 2, kind: input, shape index: {}]
  %s3 = inlined_call_operand.vmem [shape: bf16[128,128], index: 3, kind: input, shape index: {}]
  %s4 = inlined_call_operand.vmem [shape: f32[1,128], index: 4, kind: input, shape index: {}]
  %s5 = inlined_call_operand.hbm [shape: bf16[128,128], index: 5, kind: input, shape index: {}]
  %s6 = inlined_call_operand.vmem [shape: f32[1,128], index: 6, kind: input, shape index: {}]
  %s7 = inlined_call_operand.vmem [shape: bf16[128,16], index: 7, kind: input, shape index: {}]
  %s8 = inlined_call_operand.vmem [shape: f32[1,16], index: 8, kind: input, shape index: {}]
  %s9 = inlined_call_operand.vmem [shape: f32[1,16], index: 9, kind: input, shape index: {}]
  %s10 = inlined_call_operand.vmem [shape: f32[1,16], index: 10, kind: input, shape index: {}]
  %s11 = inlined_call_operand.hbm [shape: f32[16,16], index: 11, kind: output, shape index: {}]
  %s12 = sld [smem:[#allocation0]]
  $region62: #{tpu_custom_call.1} parent=0
    _
  %s14 = ssub.s32 1, %s12
  %s15 = scalar_select 0, %s14, %s12
  $region1: #{tpu_custom_call.1} parent=0
    #allocation2 [shape = 'u8[8192]{0}', space=vmem, size = 0x2000, scoped, tag = 'input window, operand 1, single buffered']
    #allocation3 [shape = 's32[1]{0}', space=sflag, size = 0x4, scoped, tag = 'scoped memory for tpu_custom_call.1']
    #allocation4 [shape = 's32[1]{0}', space=sflag, size = 0x4, scoped, tag = 'scoped memory for tpu_custom_call.1']
    #allocation5 [shape = 'u8[32768]{0}', space=vmem, size = 0x8000, scoped, tag = 'input window, operand 5, single buffered']
    #allocation6 [shape = 's32[1]{0}', space=sflag, size = 0x4, scoped, tag = 'scoped memory for tpu_custom_call.1']
    #allocation7 [shape = 'u8[8192]{0}', space=vmem, size = 0x2000, scoped, tag = 'output window, operand 0, single buffered']
    %16 = vsyncpa [#allocation3], 0
    %17 = vsyncpa [#allocation6], 0
    %18 = vsyncpa [#allocation4], 0
    // Predicated region
    $region2: #{tpu_custom_call.1} parent=1 // pred_check
      _
    $region3: #{tpu_custom_call.1} parent=1 // pred_check_branch
      %20 = sbr.rel (0) target = $region5
    $region4: #{tpu_custom_call.1} parent=1 // pred_region
      _
    $region5: #{tpu_custom_call.1} parent=1 // pred_fallthru
      _
    // Predicated region
    $region6: #{tpu_custom_call.1} parent=1 // pred_check
      _
    $region7: #{tpu_custom_call.1} parent=1 // pred_check_branch
      %22 = sbr.rel (0) target = $region9
    $region8: #{tpu_custom_call.1} parent=1 // pred_region
      %s24 = ssub.s32 256, 256
      %25 = vsyncadd [#allocation3], %s24
      %s26 = sshll.u32 [#allocation2], 4
      %s27 = int_to_ptr.vmem [resolvable:$true] %s26
      %32 = dma.hbm_to_vmem [thread:$0]  %s1, 256, %s27, [#allocation3], 64, 64, 4
    $region9: #{tpu_custom_call.1} parent=1 // pred_fallthru
      _
    // Predicated region
    $region10: #{tpu_custom_call.1} parent=1 // pred_check
      _
    $region11: #{tpu_custom_call.1} parent=1 // pred_check_branch
      %34 = sbr.rel (0) target = $region13
    $region12: #{tpu_custom_call.1} parent=1 // pred_region
      _
    $region13: #{tpu_custom_call.1} parent=1 // pred_fallthru
      _
    // Predicated region
    $region14: #{tpu_custom_call.1} parent=1 // pred_check
      _
    $region15: #{tpu_custom_call.1} parent=1 // pred_check_branch
      %36 = sbr.rel (0) target = $region17
    $region16: #{tpu_custom_call.1} parent=1 // pred_region
      _
    $region17: #{tpu_custom_call.1} parent=1 // pred_fallthru
      _
    // Predicated region
    $region18: #{tpu_custom_call.1} parent=1 // pred_check
      _
    $region19: #{tpu_custom_call.1} parent=1 // pred_check_branch
      %38 = sbr.rel (0) target = $region21
    $region20: #{tpu_custom_call.1} parent=1 // pred_region
      _
    $region21: #{tpu_custom_call.1} parent=1 // pred_fallthru
      _
    // Predicated region
    $region22: #{tpu_custom_call.1} parent=1 // pred_check
      _
    $region23: #{tpu_custom_call.1} parent=1 // pred_check_branch
      %40 = sbr.rel (0) target = $region25
    $region24: #{tpu_custom_call.1} parent=1 // pred_region
      %s42 = ssub.s32 1024, 1024
      %43 = vsyncadd [#allocation6], %s42
      %s44 = sshll.u32 [#allocation5], 4
      %s45 = int_to_ptr.vmem [resolvable:$true] %s44
      %50 = dma.hbm_to_vmem [thread:$0]  %s5, 1024, %s45, [#allocation6], 64, 64, 4
    $region25: #{tpu_custom_call.1} parent=1 // pred_fallthru
      _
    // Predicated region
    $region26: #{tpu_custom_call.1} parent=1 // pred_check
      _
    $region27: #{tpu_custom_call.1} parent=1 // pred_check_branch
      %52 = sbr.rel (0) target = $region29
    $region28: #{tpu_custom_call.1} parent=1 // pred_region
      _
    $region29: #{tpu_custom_call.1} parent=1 // pred_fallthru
      _
    // Predicated region
    $region30: #{tpu_custom_call.1} parent=1 // pred_check
      _
    $region31: #{tpu_custom_call.1} parent=1 // pred_check_branch
      %54 = sbr.rel (0) target = $region33
    $region32: #{tpu_custom_call.1} parent=1 // pred_region
      _
    $region33: #{tpu_custom_call.1} parent=1 // pred_fallthru
      _
    // Predicated region
    $region34: #{tpu_custom_call.1} parent=1 // pred_check
      _
    $region35: #{tpu_custom_call.1} parent=1 // pred_check_branch
      %56 = sbr.rel (0) target = $region37
    $region36: #{tpu_custom_call.1} parent=1 // pred_region
      _
    $region37: #{tpu_custom_call.1} parent=1 // pred_fallthru
      _
    // Predicated region
    $region38: #{tpu_custom_call.1} parent=1 // pred_check
      _
    $region39: #{tpu_custom_call.1} parent=1 // pred_check_branch
      %58 = sbr.rel (0) target = $region41
    $region40: #{tpu_custom_call.1} parent=1 // pred_region
      _
    $region41: #{tpu_custom_call.1} parent=1 // pred_fallthru
      _
    // Predicated region
    $region42: #{tpu_custom_call.1} parent=1 // pred_check
      _
    $region43: #{tpu_custom_call.1} parent=1 // pred_check_branch
      %60 = sbr.rel (0) target = $region45
    $region44: #{tpu_custom_call.1} parent=1 // pred_region
      _
    $region45: #{tpu_custom_call.1} parent=1 // pred_fallthru
      _
    // Predicated region
    $region46: #{tpu_custom_call.1} parent=1 // pred_check
      _
    $region47: #{tpu_custom_call.1} parent=1 // pred_check_branch
      %62 = sbr.rel (0) target = $region49
    $region48: #{tpu_custom_call.1} parent=1 // pred_region
      %63 = dma.done [#allocation3], 256
    $region49: #{tpu_custom_call.1} parent=1 // pred_fallthru
      _
    // Predicated region
    $region50: #{tpu_custom_call.1} parent=1 // pred_check
      _
    $region51: #{tpu_custom_call.1} parent=1 // pred_check_branch
      %65 = sbr.rel (0) target = $region53
    $region52: #{tpu_custom_call.1} parent=1 // pred_region
      %66 = dma.done [#allocation6], 1024
    $region53: #{tpu_custom_call.1} parent=1 // pred_fallthru
      _
    %v68 = vld [vmem:[%s0] sm:$0xff]
    %v69 = vld [vmem:[%s0 + $0x8] sm:$0xff]
    %v70 = vpack.c.bf16 %v69, %v68
    %v71 = vld [vmem:[#allocation2] sm:$0xf]
    %v72 = vld [vmem:[#allocation2 + $0x4] sm:$0xf]
    %v73 = vld [vmem:[#allocation2 + $0x8] sm:$0xf]
    %v74 = vld [vmem:[#allocation2 + $0xc] sm:$0xf]
    %v75 = vld [vmem:[%s2] sm:$0x1]
    %v77 = vlaneseq
    %v78 = vshrl.u32 %v77, 7
    %v79 = vsub.s32 0, %v78
    %v80 = vrot.slane %v75, %v79
    %v86 = vunpack.c.l.b16 %v71
    %v87 = vunpack.c.l.b16 %v72
    %v88 = vunpack.c.l.b16 %v73
    %v89 = vunpack.c.l.b16 %v74
    %v90 = vpack.c.b16 %v87, %v86
    %v91 = vpack.c.b16 %v89, %v88
    %vm94 = vcmask 261120
    %v96 = vsel %vm94, %v70, 0
    %98 = vmatprep.subr.bf16.mxu0 0
    %99 = vmatpush1.bf16.msra.mxu0 %v90
    %100 = vmatprep.subr.bf16.mxu0 0
    %101 = vmatpush1.bf16.msra.mxu0 %v91
    %102 = vmatprep.subr.bf16.mxu0 0
    %103 = vmatpush1.bf16.msra.mxu0 0
    %104 = vmatprep.subr.bf16.mxu0 0
    %105 = vmatpush1.bf16.msra.mxu0 0
    %106 = vmatprep.subr.bf16.mxu0 0
    %107 = vmatpush1.bf16.msra.mxu0 0
    %108 = vmatprep.subr.bf16.mxu0 0
    %109 = vmatpush1.bf16.msra.mxu0 0
    %110 = vmatprep.subr.bf16.mxu0 0
    %111 = vmatpush1.bf16.msra.mxu0 0
    %112 = vmatprep.subr.bf16.mxu0 0
    %113 = vmatpush1.bf16.msra.mxu0 0
    %114 = vmatprep.subr.bf16.mxu0 0
    %115 = vmatpush1.bf16.msra.mxu0 0
    %116 = vmatprep.subr.bf16.mxu0 0
    %117 = vmatpush1.bf16.msra.mxu0 0
    %118 = vmatprep.subr.bf16.mxu0 0
    %119 = vmatpush1.bf16.msra.mxu0 0
    %120 = vmatprep.subr.bf16.mxu0 0
    %121 = vmatpush1.bf16.msra.mxu0 0
    %122 = vmatprep.subr.bf16.mxu0 0
    %123 = vmatpush1.bf16.msra.mxu0 0
    %124 = vmatprep.subr.bf16.mxu0 0
    %125 = vmatpush1.bf16.msra.mxu0 0
    %126 = vmatprep.subr.bf16.mxu0 0
    %127 = vmatpush1.bf16.msra.mxu0 0
    %128 = vmatprep.subr.bf16.mxu0 0
    %129 = vmatpush1.bf16.msra.mxu0 0
    %130 = vmatprep.mubr.bf16.mxu0 0
    %131 = vmatmul.mubr.bf16.gmra.mrb[0].mxu0 %v96
    %v132 = vpop.f32.mrb[0].mxu0
    %v133 = vadd.f32 %v80, %v132
    %v134 = vpop.f32.mrb[0].mxu0
    %v135 = vpop.f32.mrb[0].mxu0
    %v136 = vadd.f32 %v80, %v135
    %v137 = vpop.f32.mrb[0].mxu0
    %138 = vdwg.mxu0
    %v139 = vmax.f32 %v133, 0.0
    %v140 = vmax.f32 %v136, 0.0
    %v141 = vpack.c.bf16 %v140, %v139
    %v142 = vld [vmem:[%s3] sm:$0xf]
    %v143 = vld [vmem:[%s3 + $0x4] sm:$0xf]
    %v144 = vld [vmem:[%s3 + $0x8] sm:$0xf]
    %v145 = vld [vmem:[%s3 + $0xc] sm:$0xf]
    %v146 = vld [vmem:[%s3 + $0x10] sm:$0xf]
    %v147 = vld [vmem:[%s3 + $0x14] sm:$0xf]
    %v148 = vld [vmem:[%s3 + $0x18] sm:$0xf]
    %v149 = vld [vmem:[%s3 + $0x1c] sm:$0xf]
    %v150 = vld [vmem:[%s3 + $0x20] sm:$0xf]
    %v151 = vld [vmem:[%s3 + $0x24] sm:$0xf]
    %v152 = vld [vmem:[%s3 + $0x28] sm:$0xf]
    %v153 = vld [vmem:[%s3 + $0x2c] sm:$0xf]
    %v154 = vld [vmem:[%s3 + $0x30] sm:$0xf]
    %v155 = vld [vmem:[%s3 + $0x34] sm:$0xf]
    %v156 = vld [vmem:[%s3 + $0x38] sm:$0xf]
    %v157 = vld [vmem:[%s3 + $0x3c] sm:$0xf]
    %v158 = vld [vmem:[%s4] sm:$0x1]
    %v160 = vlaneseq
    %v161 = vshrl.u32 %v160, 7
    %v162 = vsub.s32 0, %v161
    %v163 = vrot.slane %v158, %v162
    %v181 = vunpack.c.l.b16 %v142
    %v182 = vunpack.c.l.b16 %v143
    %v183 = vunpack.c.l.b16 %v144
    %v184 = vunpack.c.l.b16 %v145
    %v185 = vunpack.c.l.b16 %v146
    %v186 = vunpack.c.l.b16 %v147
    %v187 = vunpack.c.l.b16 %v148
    %v188 = vunpack.c.l.b16 %v149
    %v189 = vunpack.c.l.b16 %v150
    %v190 = vunpack.c.l.b16 %v151
    %v191 = vunpack.c.l.b16 %v152
    %v192 = vunpack.c.l.b16 %v153
    %v193 = vunpack.c.l.b16 %v154
    %v194 = vunpack.c.l.b16 %v155
    %v195 = vunpack.c.l.b16 %v156
    %v196 = vunpack.c.l.b16 %v157
    %v197 = vpack.c.b16 %v182, %v181
    %v198 = vpack.c.b16 %v184, %v183
    %v199 = vpack.c.b16 %v186, %v185
    %v200 = vpack.c.b16 %v188, %v187
    %v201 = vpack.c.b16 %v190, %v189
    %v202 = vpack.c.b16 %v192, %v191
    %v203 = vpack.c.b16 %v194, %v193
    %v204 = vpack.c.b16 %v196, %v195
    %213 = vmatprep.subr.bf16.mxu0 0
    %214 = vmatpush1.bf16.msra.mxu0 %v197
    %215 = vmatprep.subr.bf16.mxu0 0
    %216 = vmatpush1.bf16.msra.mxu0 %v198
    %217 = vmatprep.subr.bf16.mxu0 0
    %218 = vmatpush1.bf16.msra.mxu0 %v199
    %219 = vmatprep.subr.bf16.mxu0 0
    %220 = vmatpush1.bf16.msra.mxu0 %v200
    %221 = vmatprep.subr.bf16.mxu0 0
    %222 = vmatpush1.bf16.msra.mxu0 %v201
    %223 = vmatprep.subr.bf16.mxu0 0
    %224 = vmatpush1.bf16.msra.mxu0 %v202
    %225 = vmatprep.subr.bf16.mxu0 0
    %226 = vmatpush1.bf16.msra.mxu0 %v203
    %227 = vmatprep.subr.bf16.mxu0 0
    %228 = vmatpush1.bf16.msra.mxu0 %v204
    %229 = vmatprep.subr.bf16.mxu0 0
    %230 = vmatpush1.bf16.msra.mxu0 0
    %231 = vmatprep.subr.bf16.mxu0 0
    %232 = vmatpush1.bf16.msra.mxu0 0
    %233 = vmatprep.subr.bf16.mxu0 0
    %234 = vmatpush1.bf16.msra.mxu0 0
    %235 = vmatprep.subr.bf16.mxu0 0
    %236 = vmatpush1.bf16.msra.mxu0 0
    %237 = vmatprep.subr.bf16.mxu0 0
    %238 = vmatpush1.bf16.msra.mxu0 0
    %239 = vmatprep.subr.bf16.mxu0 0
    %240 = vmatpush1.bf16.msra.mxu0 0
    %241 = vmatprep.subr.bf16.mxu0 0
    %242 = vmatpush1.bf16.msra.mxu0 0
    %243 = vmatprep.subr.bf16.mxu0 0
    %244 = vmatpush1.bf16.msra.mxu0 0
    %245 = vmatprep.mubr.bf16.mxu0 0
    %246 = vmatmul.mubr.bf16.gmra.mrb[0].mxu0 %v141
    %v247 = vpop.f32.mrb[0].mxu0
    %v248 = vadd.f32 %v163, %v247
    %v249 = vpop.f32.mrb[0].mxu0
    %v250 = vpop.f32.mrb[0].mxu0
    %v251 = vadd.f32 %v163, %v250
    %v252 = vpop.f32.mrb[0].mxu0
    %253 = vdwg.mxu0
    %v254 = vmax.f32 %v248, 0.0
    %v255 = vmax.f32 %v251, 0.0
    %v256 = vpack.c.bf16 %v255, %v254
    %v257 = vld [vmem:[#allocation5] sm:$0xf]
    %v258 = vld [vmem:[#allocation5 + $0x4] sm:$0xf]
    %v259 = vld [vmem:[#allocation5 + $0x8] sm:$0xf]
    %v260 = vld [vmem:[#allocation5 + $0xc] sm:$0xf]
    %v261 = vld [vmem:[#allocation5 + $0x10] sm:$0xf]
    %v262 = vld [vmem:[#allocation5 + $0x14] sm:$0xf]
    %v263 = vld [vmem:[#allocation5 + $0x18] sm:$0xf]
    %v264 = vld [vmem:[#allocation5 + $0x1c] sm:$0xf]
    %v265 = vld [vmem:[#allocation5 + $0x20] sm:$0xf]
    %v266 = vld [vmem:[#allocation5 + $0x24] sm:$0xf]
    %v267 = vld [vmem:[#allocation5 + $0x28] sm:$0xf]
    %v268 = vld [vmem:[#allocation5 + $0x2c] sm:$0xf]
    %v269 = vld [vmem:[#allocation5 + $0x30] sm:$0xf]
    %v270 = vld [vmem:[#allocation5 + $0x34] sm:$0xf]
    %v271 = vld [vmem:[#allocation5 + $0x38] sm:$0xf]
    %v272 = vld [vmem:[#allocation5 + $0x3c] sm:$0xf]
    %v273 = vld [vmem:[%s6] sm:$0x1]
    %v275 = vlaneseq
    %v276 = vshrl.u32 %v275, 7
    %v277 = vsub.s32 0, %v276
    %v278 = vrot.slane %v273, %v277
    %v296 = vunpack.c.l.b16 %v257
    %v297 = vunpack.c.l.b16 %v258
    %v298 = vunpack.c.l.b16 %v259
    %v299 = vunpack.c.l.b16 %v260
    %v300 = vunpack.c.l.b16 %v261
    %v301 = vunpack.c.l.b16 %v262
    %v302 = vunpack.c.l.b16 %v263
    %v303 = vunpack.c.l.b16 %v264
    %v304 = vunpack.c.l.b16 %v265
    %v305 = vunpack.c.l.b16 %v266
    %v306 = vunpack.c.l.b16 %v267
    %v307 = vunpack.c.l.b16 %v268
    %v308 = vunpack.c.l.b16 %v269
    %v309 = vunpack.c.l.b16 %v270
    %v310 = vunpack.c.l.b16 %v271
    %v311 = vunpack.c.l.b16 %v272
    %v312 = vpack.c.b16 %v297, %v296
    %v313 = vpack.c.b16 %v299, %v298
    %v314 = vpack.c.b16 %v301, %v300
    %v315 = vpack.c.b16 %v303, %v302
    %v316 = vpack.c.b16 %v305, %v304
    %v317 = vpack.c.b16 %v307, %v306
    %v318 = vpack.c.b16 %v309, %v308
    %v319 = vpack.c.b16 %v311, %v310
    %328 = vmatprep.subr.bf16.mxu0 0
    %329 = vmatpush1.bf16.msra.mxu0 %v312
    %330 = vmatprep.subr.bf16.mxu0 0
    %331 = vmatpush1.bf16.msra.mxu0 %v313
    %332 = vmatprep.subr.bf16.mxu0 0
    %333 = vmatpush1.bf16.msra.mxu0 %v314
    %334 = vmatprep.subr.bf16.mxu0 0
    %335 = vmatpush1.bf16.msra.mxu0 %v315
    %336 = vmatprep.subr.bf16.mxu0 0
    %337 = vmatpush1.bf16.msra.mxu0 %v316
    %338 = vmatprep.subr.bf16.mxu0 0
    %339 = vmatpush1.bf16.msra.mxu0 %v317
    %340 = vmatprep.subr.bf16.mxu0 0
    %341 = vmatpush1.bf16.msra.mxu0 %v318
    %342 = vmatprep.subr.bf16.mxu0 0
    %343 = vmatpush1.bf16.msra.mxu0 %v319
    %344 = vmatprep.subr.bf16.mxu0 0
    %345 = vmatpush1.bf16.msra.mxu0 0
    %346 = vmatprep.subr.bf16.mxu0 0
    %347 = vmatpush1.bf16.msra.mxu0 0
    %348 = vmatprep.subr.bf16.mxu0 0
    %349 = vmatpush1.bf16.msra.mxu0 0
    %350 = vmatprep.subr.bf16.mxu0 0
    %351 = vmatpush1.bf16.msra.mxu0 0
    %352 = vmatprep.subr.bf16.mxu0 0
    %353 = vmatpush1.bf16.msra.mxu0 0
    %354 = vmatprep.subr.bf16.mxu0 0
    %355 = vmatpush1.bf16.msra.mxu0 0
    %356 = vmatprep.subr.bf16.mxu0 0
    %357 = vmatpush1.bf16.msra.mxu0 0
    %358 = vmatprep.subr.bf16.mxu0 0
    %359 = vmatpush1.bf16.msra.mxu0 0
    %360 = vmatprep.mubr.bf16.mxu0 0
    %361 = vmatmul.mubr.bf16.gmra.mrb[0].mxu0 %v256
    %v362 = vpop.f32.mrb[0].mxu0
    %v363 = vadd.f32 %v278, %v362
    %v364 = vpop.f32.mrb[0].mxu0
    %v365 = vpop.f32.mrb[0].mxu0
    %v366 = vadd.f32 %v278, %v365
    %v367 = vpop.f32.mrb[0].mxu0
    %368 = vdwg.mxu0
    %v369 = vmax.f32 %v363, 0.0
    %v370 = vmax.f32 %v366, 0.0
    %v371 = vpack.c.bf16 %v370, %v369
    %v372 = vld [vmem:[%s7] sm:$0xf]
    %v373 = vld [vmem:[%s7 + $0x4] sm:$0xf]
    %v374 = vld [vmem:[%s7 + $0x8] sm:$0xf]
    %v375 = vld [vmem:[%s7 + $0xc] sm:$0xf]
    %v376 = vld [vmem:[%s7 + $0x10] sm:$0xf]
    %v377 = vld [vmem:[%s7 + $0x14] sm:$0xf]
    %v378 = vld [vmem:[%s7 + $0x18] sm:$0xf]
    %v379 = vld [vmem:[%s7 + $0x1c] sm:$0xf]
    %v380 = vld [vmem:[%s7 + $0x20] sm:$0xf]
    %v381 = vld [vmem:[%s7 + $0x24] sm:$0xf]
    %v382 = vld [vmem:[%s7 + $0x28] sm:$0xf]
    %v383 = vld [vmem:[%s7 + $0x2c] sm:$0xf]
    %v384 = vld [vmem:[%s7 + $0x30] sm:$0xf]
    %v385 = vld [vmem:[%s7 + $0x34] sm:$0xf]
    %v386 = vld [vmem:[%s7 + $0x38] sm:$0xf]
    %v387 = vld [vmem:[%s7 + $0x3c] sm:$0xf]
    %v388 = vld [vmem:[%s8] sm:$0x1]
    %v390 = vlaneseq
    %v391 = vshrl.u32 %v390, 7
    %v392 = vsub.s32 0, %v391
    %v393 = vrot.slane %v388, %v392
    %v411 = vunpack.c.l.b16 %v372
    %v412 = vunpack.c.l.b16 %v373
    %v413 = vunpack.c.l.b16 %v374
    %v414 = vunpack.c.l.b16 %v375
    %v415 = vunpack.c.l.b16 %v376
    %v416 = vunpack.c.l.b16 %v377
    %v417 = vunpack.c.l.b16 %v378
    %v418 = vunpack.c.l.b16 %v379
    %v419 = vunpack.c.l.b16 %v380
    %v420 = vunpack.c.l.b16 %v381
    %v421 = vunpack.c.l.b16 %v382
    %v422 = vunpack.c.l.b16 %v383
    %v423 = vunpack.c.l.b16 %v384
    %v424 = vunpack.c.l.b16 %v385
    %v425 = vunpack.c.l.b16 %v386
    %v426 = vunpack.c.l.b16 %v387
    %v427 = vpack.c.b16 %v412, %v411
    %v428 = vpack.c.b16 %v414, %v413
    %v429 = vpack.c.b16 %v416, %v415
    %v430 = vpack.c.b16 %v418, %v417
    %v431 = vpack.c.b16 %v420, %v419
    %v432 = vpack.c.b16 %v422, %v421
    %v433 = vpack.c.b16 %v424, %v423
    %v434 = vpack.c.b16 %v426, %v425
    %443 = vmatprep.subr.bf16.mxu0 0
    %444 = vmatpush1.bf16.msra.mxu0 %v427
    %445 = vmatprep.subr.bf16.mxu0 0
    %446 = vmatpush1.bf16.msra.mxu0 %v428
    %447 = vmatprep.subr.bf16.mxu0 0
    %448 = vmatpush1.bf16.msra.mxu0 %v429
    %449 = vmatprep.subr.bf16.mxu0 0
    %450 = vmatpush1.bf16.msra.mxu0 %v430
    %451 = vmatprep.subr.bf16.mxu0 0
    %452 = vmatpush1.bf16.msra.mxu0 %v431
    %453 = vmatprep.subr.bf16.mxu0 0
    %454 = vmatpush1.bf16.msra.mxu0 %v432
    %455 = vmatprep.subr.bf16.mxu0 0
    %456 = vmatpush1.bf16.msra.mxu0 %v433
    %457 = vmatprep.subr.bf16.mxu0 0
    %458 = vmatpush1.bf16.msra.mxu0 %v434
    %459 = vmatprep.subr.bf16.mxu0 0
    %460 = vmatpush1.bf16.msra.mxu0 0
    %461 = vmatprep.subr.bf16.mxu0 0
    %462 = vmatpush1.bf16.msra.mxu0 0
    %463 = vmatprep.subr.bf16.mxu0 0
    %464 = vmatpush1.bf16.msra.mxu0 0
    %465 = vmatprep.subr.bf16.mxu0 0
    %466 = vmatpush1.bf16.msra.mxu0 0
    %467 = vmatprep.subr.bf16.mxu0 0
    %468 = vmatpush1.bf16.msra.mxu0 0
    %469 = vmatprep.subr.bf16.mxu0 0
    %470 = vmatpush1.bf16.msra.mxu0 0
    %471 = vmatprep.subr.bf16.mxu0 0
    %472 = vmatpush1.bf16.msra.mxu0 0
    %473 = vmatprep.subr.bf16.mxu0 0
    %474 = vmatpush1.bf16.msra.mxu0 0
    %475 = vmatprep.mubr.bf16.mxu0 0
    %476 = vmatmul.mubr.bf16.gmra.mrb[0].mxu0 %v371
    %v477 = vpop.f32.mrb[0].mxu0
    %v478 = vadd.f32 %v393, %v477
    %v479 = vpop.f32.mrb[0].mxu0
    %v480 = vpop.f32.mrb[0].mxu0
    %v481 = vadd.f32 %v393, %v480
    %v482 = vpop.f32.mrb[0].mxu0
    %483 = vdwg.mxu0
    %v484 = vadd.f32 %v478, %v68
    %v485 = vadd.f32 %v481, %v69
    %vm486 = vcmask 130048
    %v487 = vsel %vm486, %v484, 0.0
    %488 = vadd.xlane.f32.xlu0 %v487
    %v489 = vpop.xlane.xlu0 %488
    %v490 = vsel %vm486, %v485, 0.0
    %491 = vadd.xlane.f32.xlu0 %v490
    %v492 = vpop.xlane.xlu0 %491
    %v493 = vmul.f32 %v489, 0.0625
    %v494 = vmul.f32 %v492, 0.0625
    %v495 = vsub.f32 %v484, %v493
    %v496 = vsub.f32 %v485, %v494
    %v497 = vmul.f32 %v495, %v495
    %v498 = vmul.f32 %v496, %v496
    %v499 = vsel %vm486, %v497, 0.0
    %500 = vadd.xlane.f32.xlu0 %v499
    %v501 = vpop.xlane.xlu0 %500
    %v502 = vsel %vm486, %v498, 0.0
    %503 = vadd.xlane.f32.xlu0 %v502
    %v504 = vpop.xlane.xlu0 %503
    %v505 = vmul.f32 %v501, 0.0625
    %v506 = vmul.f32 %v504, 0.0625
    %v507 = vadd.f32 %v505, 1e-05
    %v508 = vadd.f32 %v506, 1e-05
    %v509 = vrsqrt.pop %v507
    %v510 = vrsqrt.pop %v508
    %v511 = vmul.f32 %v495, %v509
    %v512 = vmul.f32 %v496, %v510
    %v513 = vld [vmem:[%s9] sm:$0x1]
    %v515 = vlaneseq
    %v516 = vshrl.u32 %v515, 7
    %v517 = vsub.s32 0, %v516
    %v518 = vrot.slane %v513, %v517
    %v520 = vmul.f32 %v511, %v518
    %v521 = vmul.f32 %v512, %v518
    %v522 = vld [vmem:[%s10] sm:$0x1]
    %v524 = vlaneseq
    %v525 = vshrl.u32 %v524, 7
    %v526 = vsub.s32 0, %v525
    %v527 = vrot.slane %v522, %v526
    %v529 = vadd.f32 %v520, %v527
    %v530 = vadd.f32 %v521, %v527
    %531 = vst.msk [vmem:[#allocation7] sm:$0xff] %vm486, %v529
    %532 = vst.msk [vmem:[#allocation7 + $0x8] sm:$0xff] %vm486, %v530
    // Predicated region
    $region54: #{tpu_custom_call.1} parent=1 // pred_check
      _
    $region55: #{tpu_custom_call.1} parent=1 // pred_check_branch
      %534 = sbr.rel (0) target = $region57
    $region56: #{tpu_custom_call.1} parent=1 // pred_region
      %s536 = ssub.s32 256, 256
      %537 = vsyncadd [#allocation4], %s536
      %s538 = sshll.u32 [#allocation7], 4
      %s539 = int_to_ptr.vmem [resolvable:$true] %s538
      %544 = dma.vmem_to_hbm [thread:$0]  %s539, 256, %s11, [#allocation4], 128, 128, 8
    $region57: #{tpu_custom_call.1} parent=1 // pred_fallthru
      _
    // Predicated region
    $region58: #{tpu_custom_call.1} parent=1 // pred_check
      _
    $region59: #{tpu_custom_call.1} parent=1 // pred_check_branch
      %546 = sbr.rel (0) target = $region61
    $region60: #{tpu_custom_call.1} parent=1 // pred_region
      %547 = dma.done [#allocation4], 256
    $region61: #{tpu_custom_call.1} parent=1 // pred_fallthru
      _
    %548 = vsyncpa [#allocation3], 1
    %549 = vsyncpa [#allocation6], 1
    %550 = vsyncpa [#allocation4], 1

</llo_original>
